<compile_context>
chip_gen: v7x
topology: tpu7x:2x2x1
jax: 0.10.0
libtpu: 0.0.40
codegen_flags: <defaults>
</compile_context>

<pallas_src>
import jax
import jax.numpy as jnp
from jax.experimental import pallas as pl
from jax.experimental.pallas import tpu as pltpu


def _round_up(x, m):
    return ((x + m - 1) // m) * m


def _linear_kernel(x_ref, w_ref, b_ref, o_ref):
    # x: [TILE_B, K]   w: [K, N]   b: [1, N] (f32)   o: [TILE_B, N]
    acc = jnp.dot(x_ref[...], w_ref[...], preferred_element_type=jnp.float32)
    o_ref[...] = (acc + b_ref[...]).astype(o_ref.dtype)


def ensemble_classifier_forward(x, weight_pt, bias_pt, *, tile_b=4096):
    """Forward of ensemble_classifier.fc:  y = x @ weight_pt.T + bias_pt.

    x:         [B, n_classifiers]            classifier prediction list
    weight_pt: [output_size, n_classifiers]  PyTorch nn.Linear weight layout
    bias_pt:   [output_size]
    returns:   [B, output_size]
    """
    B, K = x.shape
    N, K2 = weight_pt.shape
    assert K == K2, "weight/in-feature mismatch"

    # ---- layout prep (done once, outside the kernel; no array padding) ----
    # Weight stored transposed ([K, N]) so the kernel body is a plain x @ W + b.
    w_t = weight_pt.T.astype(x.dtype)
    # Bias pre-cast to f32, kept 2D for a clean broadcast against the f32 accumulator.
    b_f32 = bias_pt.astype(jnp.float32).reshape(1, N)

    # Batch tile: multiple of 8 sublanes (f32), regardless of the caller's tile_b.
    TILE_B = _round_up(min(tile_b, B), 8)
    n_steps = pl.cdiv(B, TILE_B)
    # For large batches make sure there are >= 2 grid steps so the "parallel"
    # batch axis can be sharded across both TensorCores on v7x.
    if n_steps == 1 and B > 256:
        TILE_B = _round_up(pl.cdiv(B, 2), 8)
        n_steps = pl.cdiv(B, TILE_B)

    grid = (n_steps,)

    # True (unpadded) cost.
    flops = 2 * B * K * N
    bytes_accessed = (
        x.size * x.dtype.itemsize
        + w_t.size * w_t.dtype.itemsize
        + b_f32.size * b_f32.dtype.itemsize
        + B * N * x.dtype.itemsize
    )

    out = pl.pallas_call(
        _linear_kernel,
        out_shape=jax.ShapeDtypeStruct((B, N), x.dtype),
        grid_spec=pltpu.PrefetchScalarGridSpec(
            num_scalar_prefetch=0,
            grid=grid,
            in_specs=[
                # x tiled over batch -> double-buffered DMA overlaps compute.
                # Last dim K == full array dim, second-minor TILE_B % 8 == 0.
                pl.BlockSpec((TILE_B, K), lambda i: (i, 0)),
                # Constant block index: weight/bias DMA'd once, stay VMEM-resident.
                pl.BlockSpec((K, N), lambda i: (0, 0)),
                pl.BlockSpec((1, N), lambda i: (0, 0)),
            ],
            # Output block last dim == full array dim (no lane padding); Pallas
            # clips the ragged last batch block, so no post-call slicing needed.
            out_specs=pl.BlockSpec((TILE_B, N), lambda i: (i, 0)),
        ),
        compiler_params=pltpu.CompilerParams(
            # Independent batch tiles -> v7x can split the grid across its 2 TCs.
            dimension_semantics=("parallel",),
        ),
        cost_estimate=pl.CostEstimate(
            flops=flops, transcendentals=0, bytes_accessed=bytes_accessed
        ),
    )(x, w_t, b_f32)

    return out


if __name__ == "__main__":
    # Module hyperparameters (small, consistent with the PyTorch forward).
    n_classifiers = 8
    output_size = 16
    batch = 2

    key = jax.random.PRNGKey(0)
    k_x, k_w, k_b = jax.random.split(key, 3)

    # PyTorch nn.Linear parameter shapes: W [out, in], b [out].
    w_pt = jax.random.normal(k_w, (output_size, n_classifiers), dtype=jnp.float32) * 0.1
    b_pt = jax.random.normal(k_b, (output_size,), dtype=jnp.float32) * 0.1

    # Input: stacked classifier predictions, shape [batch, n_classifiers].
    x = jax.random.normal(k_x, (batch, n_classifiers), dtype=jnp.float32)

    out = ensemble_classifier_forward(x, w_pt, b_pt)
    out = jax.block_until_ready(out)

    # Correctness check against a plain-JAX reference of the PyTorch forward.
    ref = x @ w_pt.T + b_pt
    assert out.shape == (batch, output_size)
    assert jnp.allclose(out, ref, atol=1e-5), "mismatch vs reference linear"

    # Larger batch: exercises the multi-step grid and the ragged last block
    # (1000 rows split into 2 tiles of 504, second block clipped at the edge).
    big_B = 1000
    xb = jax.random.normal(k_x, (big_B, n_classifiers), dtype=jnp.float32)
    outb = jax.block_until_ready(ensemble_classifier_forward(xb, w_pt, b_pt))
    refb = xb @ w_pt.T + b_pt
    assert outb.shape == (big_B, output_size)
    assert jnp.allclose(outb, refb, atol=1e-5), "mismatch vs reference linear (big batch)"

    # Non-multiple-of-8 caller tile_b must still lower cleanly (forced to x8).
    outc = jax.block_until_ready(ensemble_classifier_forward(xb, w_pt, b_pt, tile_b=500))
    assert jnp.allclose(outc, refb, atol=1e-5), "mismatch vs reference linear (odd tile)"

    print("KERNEL_OK")
</pallas_src>

<mosaic_0001>
module attributes {stable_mosaic.version = 11 : i64} {
  func.func @_linear_kernel(%arg0: i32, %arg1: memref<8x8xf32, #tpu.memory_space<vmem>>, %arg2: memref<8x16xf32, #tpu.memory_space<vmem>>, %arg3: memref<1x16xf32, #tpu.memory_space<vmem>>, %arg4: memref<8x16xf32, #tpu.memory_space<vmem>>) attributes {dimension_semantics = [#tpu.dimension_semantics<parallel>], iteration_bounds = array<i64: 1>, scalar_prefetch = 0 : i64, scratch_operands = 0 : i64, tpu.core_type = #tpu.core_type<tc>, window_params = [{transform_indices = @transform_0, window_bounds = array<i64: 8, 8>}, {pipeline_mode = #tpu.pipeline_mode<synchronous>, transform_indices = @transform_1, window_bounds = array<i64: 8, 16>}, {pipeline_mode = #tpu.pipeline_mode<synchronous>, transform_indices = @transform_2, window_bounds = array<i64: 1, 16>}, {transform_indices = @transform_3, window_bounds = array<i64: 8, 16>}]} {
    %c0 = arith.constant 0 : index
    %c0_0 = arith.constant 0 : index
    %0 = vector.load %arg1[%c0, %c0_0] : memref<8x8xf32, #tpu.memory_space<vmem>>, vector<8x8xf32>
    %c0_1 = arith.constant 0 : index
    %c0_2 = arith.constant 0 : index
    %1 = vector.load %arg2[%c0_1, %c0_2] : memref<8x16xf32, #tpu.memory_space<vmem>>, vector<8x16xf32>
    %cst = arith.constant dense<0.000000e+00> : vector<8x16xf32>
    %2 = tpu.matmul %0, %1, %cst {dimension_numbers = #tpu.dot_dimension_numbers<[1], [0], [0], [1], [0, 0, 1, 1], [], []>} : vector<8x8xf32>, vector<8x16xf32>, vector<8x16xf32> -> vector<8x16xf32>
    %c0_3 = arith.constant 0 : index
    %c0_4 = arith.constant 0 : index
    %3 = vector.load %arg3[%c0_3, %c0_4] : memref<1x16xf32, #tpu.memory_space<vmem>>, vector<1x16xf32>
    %4 = vector.broadcast %3 : vector<1x16xf32> to vector<8x16xf32>
    %5 = arith.addf %2, %4 : vector<8x16xf32>
    %c0_5 = arith.constant 0 : index
    %c0_6 = arith.constant 0 : index
    %6 = vector.load %arg4[%c0_5, %c0_6] : memref<8x16xf32, #tpu.memory_space<vmem>>, vector<8x16xf32>
    tpu.vector_store %arg4[%c0_5, %c0_6], %5 {strides = array<i32>} : memref<8x16xf32, #tpu.memory_space<vmem>>, vector<8x16xf32>,
    return
  }
  func.func @transform_0(%arg0: i32) -> (i32, i32) {
    %c0_i32 = arith.constant 0 : i32
    %c0_i32_0 = arith.constant 0 : i32
    return %arg0, %c0_i32 : i32, i32
  }
  func.func @transform_1(%arg0: i32) -> (i32, i32) {
    %c0_i32 = arith.constant 0 : i32
    %c0_i32_0 = arith.constant 0 : i32
    %c0_i32_1 = arith.constant 0 : i32
    return %c0_i32, %c0_i32_0 : i32, i32
  }
  func.func @transform_2(%arg0: i32) -> (i32, i32) {
    %c0_i32 = arith.constant 0 : i32
    %c0_i32_0 = arith.constant 0 : i32
    %c0_i32_1 = arith.constant 0 : i32
    return %c0_i32, %c0_i32_0 : i32, i32
  }
  func.func @transform_3(%arg0: i32) -> (i32, i32) {
    %c0_i32 = arith.constant 0 : i32
    %c0_i32_0 = arith.constant 0 : i32
    return %arg0, %c0_i32 : i32, i32
  }
}

</mosaic_0001>

<llo_original>
// kernel: tpu_custom_call.1
$region0: #{tpu_custom_call.1}
  #allocation0 [shape = 'u32[]', space=smem, size = 0x4, offset = 0x4, fixed_abs, tag = 'smem constant byte address 0x4 - core index']
  #allocation1 [shape = 'u32[144,128]{1,0:T(1,128)}', space=vmem, size = 0x12000, scoped, tag = 'internal scratch']
  %s0 = inlined_call_operand.hbm [shape: f32[2,8], index: 0, kind: input, shape index: {}]
  %s1 = inlined_call_operand.hbm [shape: f32[8,16], index: 1, kind: input, shape index: {}]
  %s2 = inlined_call_operand.vmem [shape: f32[1,16], index: 2, kind: input, shape index: {}]
  %s3 = inlined_call_operand.hbm [shape: f32[2,16], index: 3, kind: output, shape index: {}]
  %s4 = sld [smem:[#allocation0]]
  $region30: #{tpu_custom_call.1} parent=0
    _
  %s6 = ssub.s32 1, %s4
  %s7 = scalar_select 0, %s6, %s4
  $region1: #{tpu_custom_call.1} parent=0
    #allocation2 [shape = 'u8[4096]{0}', space=vmem, size = 0x1000, scoped, tag = 'input window, operand 0, single buffered']
    #allocation3 [shape = 's32[1]{0}', space=sflag, size = 0x4, scoped, tag = 'scoped memory for tpu_custom_call.1']
    #allocation4 [shape = 's32[1]{0}', space=sflag, size = 0x4, scoped, tag = 'scoped memory for tpu_custom_call.1']
    #allocation5 [shape = 'u8[4096]{0}', space=vmem, size = 0x1000, scoped, tag = 'input window, operand 1, single buffered']
    #allocation6 [shape = 's32[1]{0}', space=sflag, size = 0x4, scoped, tag = 'scoped memory for tpu_custom_call.1']
    #allocation7 [shape = 'u8[4096]{0}', space=vmem, size = 0x1000, scoped, tag = 'output window, operand 0, single buffered']
    %8 = vsyncpa [#allocation3], 0
    %9 = vsyncpa [#allocation6], 0
    %10 = vsyncpa [#allocation4], 0
    // Predicated region
    $region2: #{tpu_custom_call.1} parent=1 // pred_check
      _
    $region3: #{tpu_custom_call.1} parent=1 // pred_check_branch
      %12 = sbr.rel (0) target = $region5
    $region4: #{tpu_custom_call.1} parent=1 // pred_region
      %s14 = ssub.s32 128, 32
      %15 = vsyncadd [#allocation3], %s14
      %s16 = sshll.u32 [#allocation2], 4
      %s17 = int_to_ptr.vmem [resolvable:$true] %s16
      %22 = dma.hbm_to_vmem [thread:$0]  %s0, 32, %s17, [#allocation3], 32, 32, 2
    $region5: #{tpu_custom_call.1} parent=1 // pred_fallthru
      _
    // Predicated region
    $region6: #{tpu_custom_call.1} parent=1 // pred_check
      _
    $region7: #{tpu_custom_call.1} parent=1 // pred_check_branch
      %24 = sbr.rel (0) target = $region9
    $region8: #{tpu_custom_call.1} parent=1 // pred_region
      %s26 = ssub.s32 128, 128
      %27 = vsyncadd [#allocation6], %s26
      %s29 = sshll.u32 [#allocation5], 4
      %s30 = int_to_ptr.vmem [resolvable:$true] %s29
      %32 = dma.hbm_to_vmem [thread:$0]  %s1, 128, %s30, [#allocation6]
    $region9: #{tpu_custom_call.1} parent=1 // pred_fallthru
      _
    // Predicated region
    $region10: #{tpu_custom_call.1} parent=1 // pred_check
      _
    $region11: #{tpu_custom_call.1} parent=1 // pred_check_branch
      %34 = sbr.rel (0) target = $region13
    $region12: #{tpu_custom_call.1} parent=1 // pred_region
      _
    $region13: #{tpu_custom_call.1} parent=1 // pred_fallthru
      _
    // Predicated region
    $region14: #{tpu_custom_call.1} parent=1 // pred_check
      _
    $region15: #{tpu_custom_call.1} parent=1 // pred_check_branch
      %36 = sbr.rel (0) target = $region17
    $region16: #{tpu_custom_call.1} parent=1 // pred_region
      %37 = dma.done [#allocation3], 128
    $region17: #{tpu_custom_call.1} parent=1 // pred_fallthru
      _
    // Predicated region
    $region18: #{tpu_custom_call.1} parent=1 // pred_check
      _
    $region19: #{tpu_custom_call.1} parent=1 // pred_check_branch
      %39 = sbr.rel (0) target = $region21
    $region20: #{tpu_custom_call.1} parent=1 // pred_region
      %40 = dma.done [#allocation6], 128
    $region21: #{tpu_custom_call.1} parent=1 // pred_fallthru
      _
    %v41 = vld [vmem:[#allocation2] sm:$0xff]
    %v42 = vld [vmem:[#allocation5] sm:$0xff]
    %v43 = vld [vmem:[%s2] sm:$0x1]
    %v45 = vlaneseq
    %v46 = vshrl.u32 %v45, 7
    %v47 = vsub.s32 0, %v46
    %v48 = vrot.slane %v43, %v47
    %vm50 = vcmask 64512
    %v52 = vsel %vm50, %v41, 0
    %54 = vmatprep.subr.mxu0 0.0
    %55 = vmatpush1.msra.mxu0 %v42
    %56 = vmatprep.subr.mxu0 0.0
    %57 = vmatpush1.msra.mxu0 0.0
    %58 = vmatprep.subr.mxu0 0.0
    %59 = vmatpush1.msra.mxu0 0.0
    %60 = vmatprep.subr.mxu0 0.0
    %61 = vmatpush1.msra.mxu0 0.0
    %62 = vmatprep.subr.mxu0 0.0
    %63 = vmatpush1.msra.mxu0 0.0
    %64 = vmatprep.subr.mxu0 0.0
    %65 = vmatpush1.msra.mxu0 0.0
    %66 = vmatprep.subr.mxu0 0.0
    %67 = vmatpush1.msra.mxu0 0.0
    %68 = vmatprep.subr.mxu0 0.0
    %69 = vmatpush1.msra.mxu0 0.0
    %70 = vmatprep.subr.mxu0 0.0
    %71 = vmatpush1.msra.mxu0 0.0
    %72 = vmatprep.subr.mxu0 0.0
    %73 = vmatpush1.msra.mxu0 0.0
    %74 = vmatprep.subr.mxu0 0.0
    %75 = vmatpush1.msra.mxu0 0.0
    %76 = vmatprep.subr.mxu0 0.0
    %77 = vmatpush1.msra.mxu0 0.0
    %78 = vmatprep.subr.mxu0 0.0
    %79 = vmatpush1.msra.mxu0 0.0
    %80 = vmatprep.subr.mxu0 0.0
    %81 = vmatpush1.msra.mxu0 0.0
    %82 = vmatprep.subr.mxu0 0.0
    %83 = vmatpush1.msra.mxu0 0.0
    %84 = vmatprep.subr.mxu0 0.0
    %85 = vmatpush1.msra.mxu0 0.0
    %86 = vmatprep.subr.mxu0 0.0
    %87 = vmatpush1.msra.mxu0 0.0
    %88 = vmatprep.subr.mxu0 0.0
    %89 = vmatpush1.msra.mxu0 0.0
    %90 = vmatprep.subr.mxu0 0.0
    %91 = vmatpush1.msra.mxu0 0.0
    %92 = vmatprep.subr.mxu0 0.0
    %93 = vmatpush1.msra.mxu0 0.0
    %94 = vmatprep.subr.mxu0 0.0
    %95 = vmatpush1.msra.mxu0 0.0
    %96 = vmatprep.subr.mxu0 0.0
    %97 = vmatpush1.msra.mxu0 0.0
    %98 = vmatprep.subr.mxu0 0.0
    %99 = vmatpush1.msra.mxu0 0.0
    %100 = vmatprep.subr.mxu0 0.0
    %101 = vmatpush1.msra.mxu0 0.0
    %102 = vmatprep.subr.mxu0 0.0
    %103 = vmatpush1.msra.mxu0 0.0
    %104 = vmatprep.subr.mxu0 0.0
    %105 = vmatpush1.msra.mxu0 0.0
    %106 = vmatprep.subr.mxu0 0.0
    %107 = vmatpush1.msra.mxu0 0.0
    %108 = vmatprep.subr.mxu0 0.0
    %109 = vmatpush1.msra.mxu0 0.0
    %110 = vmatprep.subr.mxu0 0.0
    %111 = vmatpush1.msra.mxu0 0.0
    %112 = vmatprep.subr.mxu0 0.0
    %113 = vmatpush1.msra.mxu0 0.0
    %114 = vmatprep.subr.mxu0 0.0
    %115 = vmatpush1.msra.mxu0 0.0
    %116 = vmatprep.subr.mxu0 0.0
    %117 = vmatpush1.msra.mxu0 0.0
    %118 = vmatprep.mubr.f32.mxu0 0.0
    %119 = vmatmul.mubr.f32.gmra.mrb[0].mxu0 %v52
    %v120 = vpop.f32.mrb[0].mxu0
    %v121 = vadd.f32 %v48, %v120
    %v122 = vpop.f32.mrb[0].mxu0
    %123 = vdwg.mxu0
    %vm124 = vcmask 130048
    %125 = vst.msk [vmem:[#allocation7] sm:$0xff] %vm124, %v121
    // Predicated region
    $region22: #{tpu_custom_call.1} parent=1 // pred_check
      _
    $region23: #{tpu_custom_call.1} parent=1 // pred_check_branch
      %127 = sbr.rel (0) target = $region25
    $region24: #{tpu_custom_call.1} parent=1 // pred_region
      %s129 = ssub.s32 128, 32
      %130 = vsyncadd [#allocation4], %s129
      %s131 = sshll.u32 [#allocation7], 4
      %s132 = int_to_ptr.vmem [resolvable:$true] %s131
      %137 = dma.vmem_to_hbm [thread:$0]  %s132, 32, %s3, [#allocation4], 32, 32, 2
    $region25: #{tpu_custom_call.1} parent=1 // pred_fallthru
      _
    // Predicated region
    $region26: #{tpu_custom_call.1} parent=1 // pred_check
      _
    $region27: #{tpu_custom_call.1} parent=1 // pred_check_branch
      %139 = sbr.rel (0) target = $region29
    $region28: #{tpu_custom_call.1} parent=1 // pred_region
      %140 = dma.done [#allocation4], 128
    $region29: #{tpu_custom_call.1} parent=1 // pred_fallthru
      _
    %141 = vsyncpa [#allocation3], 1
    %142 = vsyncpa [#allocation6], 1
    %143 = vsyncpa [#allocation4], 1

</llo_original>
